<compile_context>
chip_gen: v7x
topology: tpu7x:2x2x1
jax: 0.10.0
libtpu: 0.0.40
codegen_flags: <defaults>
</compile_context>

<pallas_src>
import functools
import math

import jax
import jax.numpy as jnp
from jax.experimental import pallas as pl
from jax.experimental.pallas import tpu as pltpu

_LN2 = math.log(2.0)
_LANES = 128


def _round_up(a, m):
    return -(-a // m) * m


# ----------------------------------------------------------------------------
# BugLocalizationDNN forward pass (fused MLP kernel)
# ----------------------------------------------------------------------------
def _dnn_forward_kernel(x_ref, w1_ref, b1_ref, w2_ref, b2_ref, w3_ref, b3_ref,
                        w4_ref, b4_ref, o_ref):
    # fc1 -> relu: bf16 operands, f32 accumulation on the MXU.
    h = jnp.maximum(
        jnp.dot(x_ref[...], w1_ref[...], preferred_element_type=jnp.float32)
        + b1_ref[...], 0.0)                                    # (TB, 128) f32
    # Dropout(p=0.4): identity at inference.
    h = jnp.maximum(
        jnp.dot(h.astype(jnp.bfloat16), w2_ref[...],
                preferred_element_type=jnp.float32) + b2_ref[...], 0.0)  # (TB, 64)
    h = jnp.maximum(
        jnp.dot(h.astype(jnp.bfloat16), w3_ref[...],
                preferred_element_type=jnp.float32) + b3_ref[...], 0.0)  # (TB, 32)
    # Output layer (32 -> 1) with the batch mapped to lanes so the store is a
    # lane-dense (1, TB) row: z[0, b] = sum_d w4[0, d] * h[b, d] + b4.
    z = jax.lax.dot_general(w4_ref[...], h, (((1,), (1,)), ((), ())),
                            preferred_element_type=jnp.float32)  # (1, TB)
    z = z + b4_ref[...]
    o_ref[...] = jax.nn.sigmoid(z).astype(o_ref.dtype)


def bug_localization_dnn_forward(x, params, *, block_b=512):
    """Pallas equivalent of BugLocalizationDNN.forward (inference mode).

    x: (B, input_dim) float array.
    params: (w1 (D,128), b1 (1,128), w2 (128,64), b2 (1,64),
             w3 (64,32), b3 (1,32), w4 (1,32), b4 (1,1)).
    Returns (B, 1) float32 probabilities.
    """
    assert block_b % _LANES == 0
    w1, b1, w2, b2, w3, b3, w4, b4 = params
    B, D = x.shape

    # bf16 activation/weight streams (MXU native rate, half the HBM traffic);
    # biases and the tiny final layer stay f32.
    xb = x.astype(jnp.bfloat16)
    w1b, w2b, w3b = (w.astype(jnp.bfloat16) for w in (w1, w2, w3))
    b1f, b2f, b3f = (b.astype(jnp.float32) for b in (b1, b2, b3))
    w4f, b4f = w4.astype(jnp.float32), b4.astype(jnp.float32)

    # Batch tile: multiple of 128 (lane-dense output), capped at block_b, and
    # chosen so the grid has >= 2 steps whenever B >= 256 (v7x has 2 TCs and
    # shards the "parallel" axis across them).
    B128 = _round_up(B, _LANES)
    half = _round_up(-(-B128 // 2), _LANES)
    TB = max(_LANES, min(block_b, half))
    pB = _round_up(B128, TB)
    if pB != B:
        xb = jnp.pad(xb, ((0, pB - B), (0, 0)))

    full = lambda a: pl.BlockSpec(a.shape, lambda i: (0, 0))
    out = pl.pallas_call(
        _dnn_forward_kernel,
        out_shape=jax.ShapeDtypeStruct((1, pB), jnp.float32),
        grid=(pB // TB,),
        in_specs=[pl.BlockSpec((TB, D), lambda i: (i, 0)),
                  full(w1b), full(b1f), full(w2b), full(b2f),
                  full(w3b), full(b3f), full(w4f), full(b4f)],
        out_specs=pl.BlockSpec((1, TB), lambda i: (0, i)),
        compiler_params=pltpu.CompilerParams(
            dimension_semantics=("parallel",),
            vmem_limit_bytes=32 * 1024 * 1024),
    )(xb, w1b, b1f, w2b, b2f, w3b, b3f, w4f, b4f)
    return out[0, :B].reshape(B, 1)


def _ref_dnn_forward(x, params):
    w1, b1, w2, b2, w3, b3, w4, b4 = params
    h = jax.nn.relu(x @ w1 + b1)
    h = jax.nn.relu(h @ w2 + b2)
    h = jax.nn.relu(h @ w3 + b3)
    return jax.nn.sigmoid(h @ w4.T + b4)


# ----------------------------------------------------------------------------
# FocalLoss (custom loss from the same file)
# ----------------------------------------------------------------------------
def _focal_loss_kernel(x_ref, t_ref, *rest, alpha, gamma, inv_n, use_ranks,
                       block_rows):
    if use_ranks:
        r_ref, o_ref, acc_ref = rest
    else:
        r_ref = None
        o_ref, acc_ref = rest

    i = pl.program_id(0)

    @pl.when(i == 0)
    def _():
        acc_ref[...] = jnp.zeros_like(acc_ref)

    p = x_ref[...]                              # (block_rows, 128) f32
    t = t_ref[...].astype(jnp.float32)          # int8 {0,1} -> f32

    # F.binary_cross_entropy clamps log terms at -100.  Zero padding yields
    # p = t = 0 -> bce = 0 -> focal = 0, so no explicit padding mask is needed.
    log_p = jnp.maximum(jnp.log(p), -100.0)
    log_1mp = jnp.maximum(jnp.log(1.0 - p), -100.0)
    bce = -(t * log_p + (1.0 - t) * log_1mp)

    pt = jnp.where(t == 1.0, p, 1.0 - p)
    q = 1.0 - pt
    # Integer gamma -> repeated multiply (no pow -> no extra exp/log on EUP).
    if float(gamma).is_integer() and 0 <= int(gamma) <= 4:
        g = int(gamma)
        mod = jnp.ones_like(q) if g == 0 else q
        for _ in range(max(g - 1, 0)):
            mod = mod * q
    else:
        mod = jnp.power(jnp.maximum(q, 0.0), gamma)
    focal = alpha * mod * bce

    if use_ranks:
        r = r_ref[...].astype(jnp.float32)      # bf16 -> f32
        # 1/log2(2+r) == ln2 / ln(2+r); approx reciprocal runs on the EUP slot.
        # TODO(synk): on v5e re-check whether the EUP (2-3 f32 transcendentals
        # per element) becomes the binding slot now that the mask work is gone.
        focal = focal * (_LN2 * pl.reciprocal(jnp.log(2.0 + r), approx=True))

    # Pre-reduce the tile to one (8, 128) vreg: pure-VPU adds over the leading,
    # layout-free axis.  Keeps the persistent accumulator tiny regardless of
    # block_rows and makes the finalize cross-lane reduce a single vreg.
    acc_ref[...] += jnp.sum(focal.reshape(block_rows // 8, 8, _LANES), axis=0)

    @pl.when(i == pl.num_programs(0) - 1)
    def _():
        o_ref[0, 0] = jnp.sum(acc_ref[...]) * inv_n


def focal_loss(inputs, targets, ranks=None, *, alpha=0.25, gamma=2.0,
               rank_weighting=True, block_rows_cap=2048):
    """Pallas equivalent of FocalLoss.forward. inputs/targets/ranks: (B,)."""
    assert inputs.ndim == 1 and inputs.shape == targets.shape
    b = inputs.shape[0]
    use_ranks = rank_weighting and (ranks is not None)

    # Sublane-dense layout: (rows, 128) tiles; rows kept multiples of 32 so the
    # int8 / bf16 operand tilings stay legal.
    rows = -(-b // _LANES)
    block_rows = min(block_rows_cap, _round_up(rows, 32))
    rows_padded = _round_up(rows, block_rows)
    padded = rows_padded * _LANES

    def to2d(a, dtype):
        a = a.astype(dtype)
        if padded != b:
            a = jnp.pad(a, (0, padded - b))
        return a.reshape(rows_padded, _LANES)

    # probs stay f32 (bf16 near p=1 corrupts log(1-p)); targets/ranks are
    # narrowed to cut HBM traffic.  ranks are not DMA'd at all when unused.
    operands = [to2d(inputs, jnp.float32), to2d(targets, jnp.int8)]
    if use_ranks:
        operands.append(to2d(ranks, jnp.bfloat16))

    kernel = functools.partial(
        _focal_loss_kernel, alpha=float(alpha), gamma=float(gamma),
        inv_n=1.0 / float(b), use_ranks=use_ranks, block_rows=block_rows)

    tile_spec = pl.BlockSpec((block_rows, _LANES), lambda i: (i, 0))
    # TODO(synk): v7x 2-TC partial-sum split (leading "parallel" axis with
    # per-core accumulators/outputs) not implemented; reduction runs on one TC.
    out = pl.pallas_call(
        kernel,
        out_shape=jax.ShapeDtypeStruct((1, 1), jnp.float32),
        grid=(rows_padded // block_rows,),
        in_specs=[tile_spec] * len(operands),
        out_specs=pl.BlockSpec(memory_space=pltpu.MemorySpace.SMEM),
        scratch_shapes=[pltpu.VMEM((8, _LANES), jnp.float32)],
        compiler_params=pltpu.CompilerParams(
            dimension_semantics=("arbitrary",),
            vmem_limit_bytes=32 * 1024 * 1024),
    )(*operands)
    return out[0, 0]


def _ref_focal_loss(inputs, targets, ranks, alpha=0.25, gamma=2.0,
                    rank_weighting=True):
    log_p = jnp.maximum(jnp.log(inputs), -100.0)
    log_1mp = jnp.maximum(jnp.log(1.0 - inputs), -100.0)
    bce = -(targets * log_p + (1.0 - targets) * log_1mp)
    pt = jnp.where(targets == 1.0, inputs, 1.0 - inputs)
    fl = alpha * (1.0 - pt) ** gamma * bce
    if rank_weighting and ranks is not None:
        fl = fl / jnp.log2(2.0 + ranks)
    return jnp.mean(fl)


# ----------------------------------------------------------------------------
if __name__ == "__main__":
    key = jax.random.PRNGKey(0)
    keys = jax.random.split(key, 12)

    # ---- BugLocalizationDNN forward ----
    batch, input_dim = 200, 32
    x = jax.random.normal(keys[0], (batch, input_dim), dtype=jnp.float32)
    params = (
        0.1 * jax.random.normal(keys[1], (input_dim, 128), dtype=jnp.float32),
        0.1 * jax.random.normal(keys[2], (1, 128), dtype=jnp.float32),
        0.1 * jax.random.normal(keys[3], (128, 64), dtype=jnp.float32),
        0.1 * jax.random.normal(keys[4], (1, 64), dtype=jnp.float32),
        0.1 * jax.random.normal(keys[5], (64, 32), dtype=jnp.float32),
        0.1 * jax.random.normal(keys[6], (1, 32), dtype=jnp.float32),
        0.1 * jax.random.normal(keys[7], (1, 32), dtype=jnp.float32),
        0.1 * jax.random.normal(keys[8], (1, 1), dtype=jnp.float32),
    )
    y = jax.block_until_ready(bug_localization_dnn_forward(x, params))
    y_ref = _ref_dnn_forward(x, params)
    assert y.shape == (batch, 1)
    # bf16 weight/activation streams vs f32 reference -> modest tolerance.
    assert jnp.allclose(y, y_ref, rtol=5e-2, atol=1e-2), (y[:4], y_ref[:4])

    # ---- FocalLoss (custom loss) ----
    nb = 256
    logits = jax.random.normal(keys[9], (nb,), dtype=jnp.float32)
    probs = jax.nn.sigmoid(logits)
    targets = (jax.random.uniform(keys[10], (nb,)) > 0.5).astype(jnp.float32)
    ranks = jax.random.randint(keys[11], (nb,), 0, 100).astype(jnp.float32)

    loss = jax.block_until_ready(focal_loss(probs, targets, ranks))
    ref = _ref_focal_loss(probs, targets, ranks)
    assert jnp.allclose(loss, ref, rtol=5e-3, atol=1e-6), (loss, ref)

    loss_nr = jax.block_until_ready(
        focal_loss(probs, targets, None, rank_weighting=False))
    ref_nr = _ref_focal_loss(probs, targets, None, rank_weighting=False)
    assert jnp.allclose(loss_nr, ref_nr, rtol=1e-5, atol=1e-6), (loss_nr, ref_nr)

    print("KERNEL_OK")
</pallas_src>

<mosaic_0001>
module attributes {stable_mosaic.version = 11 : i64} {
  func.func @_dnn_forward_kernel(%arg0: i32, %arg1: memref<128x32xbf16, #tpu.memory_space<vmem>>, %arg2: memref<32x128xbf16, #tpu.memory_space<vmem>>, %arg3: memref<1x128xf32, #tpu.memory_space<vmem>>, %arg4: memref<128x64xbf16, #tpu.memory_space<vmem>>, %arg5: memref<1x64xf32, #tpu.memory_space<vmem>>, %arg6: memref<64x32xbf16, #tpu.memory_space<vmem>>, %arg7: memref<1x32xf32, #tpu.memory_space<vmem>>, %arg8: memref<1x32xf32, #tpu.memory_space<vmem>>, %arg9: memref<1x1xf32, #tpu.memory_space<vmem>>, %arg10: memref<1x128xf32, #tpu.memory_space<vmem>>) attributes {dimension_semantics = [#tpu.dimension_semantics<parallel>], iteration_bounds = array<i64: 2>, scalar_prefetch = 0 : i64, scratch_operands = 0 : i64, tpu.core_type = #tpu.core_type<tc>, window_params = [{transform_indices = @transform_0, window_bounds = array<i64: 128, 32>}, {pipeline_mode = #tpu.pipeline_mode<synchronous>, transform_indices = @transform_1, window_bounds = array<i64: 32, 128>}, {pipeline_mode = #tpu.pipeline_mode<synchronous>, transform_indices = @transform_2, window_bounds = array<i64: 1, 128>}, {pipeline_mode = #tpu.pipeline_mode<synchronous>, transform_indices = @transform_3, window_bounds = array<i64: 128, 64>}, {pipeline_mode = #tpu.pipeline_mode<synchronous>, transform_indices = @transform_4, window_bounds = array<i64: 1, 64>}, {pipeline_mode = #tpu.pipeline_mode<synchronous>, transform_indices = @transform_5, window_bounds = array<i64: 64, 32>}, {pipeline_mode = #tpu.pipeline_mode<synchronous>, transform_indices = @transform_6, window_bounds = array<i64: 1, 32>}, {pipeline_mode = #tpu.pipeline_mode<synchronous>, transform_indices = @transform_7, window_bounds = array<i64: 1, 32>}, {pipeline_mode = #tpu.pipeline_mode<synchronous>, transform_indices = @transform_8, window_bounds = array<i64: 1, 1>}, {transform_indices = @transform_9, window_bounds = array<i64: 1, 128>}]} {
    %c0 = arith.constant 0 : index
    %c0_0 = arith.constant 0 : index
    %0 = vector.load %arg1[%c0, %c0_0] : memref<128x32xbf16, #tpu.memory_space<vmem>>, vector<128x32xbf16>
    %c0_1 = arith.constant 0 : index
    %c0_2 = arith.constant 0 : index
    %1 = vector.load %arg2[%c0_1, %c0_2] : memref<32x128xbf16, #tpu.memory_space<vmem>>, vector<32x128xbf16>
    %cst = arith.constant dense<0.000000e+00> : vector<128x128xf32>
    %2 = tpu.matmul %0, %1, %cst {dimension_numbers = #tpu.dot_dimension_numbers<[1], [0], [0], [1], [0, 0, 1, 1], [], []>} : vector<128x32xbf16>, vector<32x128xbf16>, vector<128x128xf32> -> vector<128x128xf32>
    %c0_3 = arith.constant 0 : index
    %c0_4 = arith.constant 0 : index
    %3 = vector.load %arg3[%c0_3, %c0_4] : memref<1x128xf32, #tpu.memory_space<vmem>>, vector<1x128xf32>
    %4 = vector.broadcast %3 : vector<1x128xf32> to vector<128x128xf32>
    %5 = arith.addf %2, %4 : vector<128x128xf32>
    %cst_5 = arith.constant 0.000000e+00 : f32
    %6 = vector.broadcast %cst_5 : f32 to vector<128x128xf32>
    %7 = arith.maximumf %5, %6 : vector<128x128xf32>
    %8 = arith.truncf %7 : vector<128x128xf32> to vector<128x128xbf16>
    %c0_6 = arith.constant 0 : index
    %c0_7 = arith.constant 0 : index
    %9 = vector.load %arg4[%c0_6, %c0_7] : memref<128x64xbf16, #tpu.memory_space<vmem>>, vector<128x64xbf16>
    %cst_8 = arith.constant dense<0.000000e+00> : vector<128x64xf32>
    %10 = tpu.matmul %8, %9, %cst_8 {dimension_numbers = #tpu.dot_dimension_numbers<[1], [0], [0], [1], [0, 0, 1, 1], [], []>} : vector<128x128xbf16>, vector<128x64xbf16>, vector<128x64xf32> -> vector<128x64xf32>
    %c0_9 = arith.constant 0 : index
    %c0_10 = arith.constant 0 : index
    %11 = vector.load %arg5[%c0_9, %c0_10] : memref<1x64xf32, #tpu.memory_space<vmem>>, vector<1x64xf32>
    %12 = vector.broadcast %11 : vector<1x64xf32> to vector<128x64xf32>
    %13 = arith.addf %10, %12 : vector<128x64xf32>
    %cst_11 = arith.constant 0.000000e+00 : f32
    %14 = vector.broadcast %cst_11 : f32 to vector<128x64xf32>
    %15 = arith.maximumf %13, %14 : vector<128x64xf32>
    %16 = arith.truncf %15 : vector<128x64xf32> to vector<128x64xbf16>
    %c0_12 = arith.constant 0 : index
    %c0_13 = arith.constant 0 : index
    %17 = vector.load %arg6[%c0_12, %c0_13] : memref<64x32xbf16, #tpu.memory_space<vmem>>, vector<64x32xbf16>
    %cst_14 = arith.constant dense<0.000000e+00> : vector<128x32xf32>
    %18 = tpu.matmul %16, %17, %cst_14 {dimension_numbers = #tpu.dot_dimension_numbers<[1], [0], [0], [1], [0, 0, 1, 1], [], []>} : vector<128x64xbf16>, vector<64x32xbf16>, vector<128x32xf32> -> vector<128x32xf32>
    %c0_15 = arith.constant 0 : index
    %c0_16 = arith.constant 0 : index
    %19 = vector.load %arg7[%c0_15, %c0_16] : memref<1x32xf32, #tpu.memory_space<vmem>>, vector<1x32xf32>
    %20 = vector.broadcast %19 : vector<1x32xf32> to vector<128x32xf32>
    %21 = arith.addf %18, %20 : vector<128x32xf32>
    %cst_17 = arith.constant 0.000000e+00 : f32
    %22 = vector.broadcast %cst_17 : f32 to vector<128x32xf32>
    %23 = arith.maximumf %21, %22 : vector<128x32xf32>
    %c0_18 = arith.constant 0 : index
    %c0_19 = arith.constant 0 : index
    %24 = vector.load %arg8[%c0_18, %c0_19] : memref<1x32xf32, #tpu.memory_space<vmem>>, vector<1x32xf32>
    %cst_20 = arith.constant dense<0.000000e+00> : vector<1x128xf32>
    %25 = tpu.matmul %24, %23, %cst_20 {dimension_numbers = #tpu.dot_dimension_numbers<[1], [1], [0], [0], [0, 0, 1, 0], [], []>} : vector<1x32xf32>, vector<128x32xf32>, vector<1x128xf32> -> vector<1x128xf32>
    %c0_21 = arith.constant 0 : index
    %c0_22 = arith.constant 0 : index
    %26 = vector.load %arg9[%c0_21, %c0_22] : memref<1x1xf32, #tpu.memory_space<vmem>>, vector<1x1xf32>
    %27 = vector.broadcast %26 : vector<1x1xf32> to vector<1x128xf32>
    %28 = arith.addf %25, %27 : vector<1x128xf32>
    %29 = arith.negf %28 : vector<1x128xf32>
    %30 = math.exp %29 : vector<1x128xf32>
    %cst_23 = arith.constant 1.000000e+00 : f32
    %31 = vector.broadcast %cst_23 : f32 to vector<1x128xf32>
    %32 = arith.addf %31, %30 : vector<1x128xf32>
    %33 = arith.divf %31, %32 : vector<1x128xf32>
    %c0_24 = arith.constant 0 : index
    %c0_25 = arith.constant 0 : index
    %34 = vector.load %arg10[%c0_24, %c0_25] : memref<1x128xf32, #tpu.memory_space<vmem>>, vector<1x128xf32>
    tpu.vector_store %arg10[%c0_24, %c0_25], %33 {strides = array<i32>} : memref<1x128xf32, #tpu.memory_space<vmem>>, vector<1x128xf32>,
    return
  }
  func.func @transform_0(%arg0: i32) -> (i32, i32) {
    %c0_i32 = arith.constant 0 : i32
    %c0_i32_0 = arith.constant 0 : i32
    return %arg0, %c0_i32 : i32, i32
  }
  func.func @transform_1(%arg0: i32) -> (i32, i32) {
    %c0_i32 = arith.constant 0 : i32
    %c0_i32_0 = arith.constant 0 : i32
    %c0_i32_1 = arith.constant 0 : i32
    return %c0_i32, %c0_i32_0 : i32, i32
  }
  func.func @transform_2(%arg0: i32) -> (i32, i32) {
    %c0_i32 = arith.constant 0 : i32
    %c0_i32_0 = arith.constant 0 : i32
    %c0_i32_1 = arith.constant 0 : i32
    return %c0_i32, %c0_i32_0 : i32, i32
  }
  func.func @transform_3(%arg0: i32) -> (i32, i32) {
    %c0_i32 = arith.constant 0 : i32
    %c0_i32_0 = arith.constant 0 : i32
    %c0_i32_1 = arith.constant 0 : i32
    return %c0_i32, %c0_i32_0 : i32, i32
  }
  func.func @transform_4(%arg0: i32) -> (i32, i32) {
    %c0_i32 = arith.constant 0 : i32
    %c0_i32_0 = arith.constant 0 : i32
    %c0_i32_1 = arith.constant 0 : i32
    return %c0_i32, %c0_i32_0 : i32, i32
  }
  func.func @transform_5(%arg0: i32) -> (i32, i32) {
    %c0_i32 = arith.constant 0 : i32
    %c0_i32_0 = arith.constant 0 : i32
    %c0_i32_1 = arith.constant 0 : i32
    return %c0_i32, %c0_i32_0 : i32, i32
  }
  func.func @transform_6(%arg0: i32) -> (i32, i32) {
    %c0_i32 = arith.constant 0 : i32
    %c0_i32_0 = arith.constant 0 : i32
    %c0_i32_1 = arith.constant 0 : i32
    return %c0_i32, %c0_i32_0 : i32, i32
  }
  func.func @transform_7(%arg0: i32) -> (i32, i32) {
    %c0_i32 = arith.constant 0 : i32
    %c0_i32_0 = arith.constant 0 : i32
    %c0_i32_1 = arith.constant 0 : i32
    return %c0_i32, %c0_i32_0 : i32, i32
  }
  func.func @transform_8(%arg0: i32) -> (i32, i32) {
    %c0_i32 = arith.constant 0 : i32
    %c0_i32_0 = arith.constant 0 : i32
    %c0_i32_1 = arith.constant 0 : i32
    return %c0_i32, %c0_i32_0 : i32, i32
  }
  func.func @transform_9(%arg0: i32) -> (i32, i32) {
    %c0_i32 = arith.constant 0 : i32
    %c0_i32_0 = arith.constant 0 : i32
    return %c0_i32, %arg0 : i32, i32
  }
}

</mosaic_0001>

<llo_original>
// kernel: tpu_custom_call.1
$region0: #{tpu_custom_call.1}
  #allocation0 [shape = 'u32[]', space=smem, size = 0x4, offset = 0x4, fixed_abs, tag = 'smem constant byte address 0x4 - core index']
  #allocation1 [shape = 'u32[144,128]{1,0:T(1,128)}', space=vmem, size = 0x12000, scoped, tag = 'internal scratch']
  #allocation2 [shape = 'f32[1,1]{1,0:T(1,128)S(1)}', space=vmem, size = 0x200, scoped, tag = 'scoped memory for tpu_custom_call.1']
  %s0 = inlined_call_operand.vmem [shape: bf16[256,32], index: 0, kind: input, shape index: {}]
  %s1 = inlined_call_operand.vmem [shape: bf16[32,128], index: 1, kind: input, shape index: {}]
  %s2 = inlined_call_operand.vmem [shape: f32[1,128], index: 2, kind: input, shape index: {}]
  %s3 = inlined_call_operand.vmem [shape: bf16[128,64], index: 3, kind: input, shape index: {}]
  %s4 = inlined_call_operand.vmem [shape: f32[1,64], index: 4, kind: input, shape index: {}]
  %s5 = inlined_call_operand.vmem [shape: bf16[64,32], index: 5, kind: input, shape index: {}]
  %s6 = inlined_call_operand.vmem [shape: f32[1,32], index: 6, kind: input, shape index: {}]
  %s7 = inlined_call_operand.vmem [shape: f32[1,32], index: 7, kind: input, shape index: {}]
  %s8 = inlined_call_operand.<no memory space> [shape: f32[1,1], index: 8, kind: input, shape index: {}]
  %s9 = inlined_call_operand.hbm [shape: f32[1,256], index: 9, kind: output, shape index: {}]
  %s10 = sld [smem:[#allocation0]]
  $region69: #{tpu_custom_call.1} parent=0
    _
  %s12 = ssub.s32 1, %s10
  %s13 = scalar_select 0, %s12, %s10
  %v14 = vstv %s8
  %15 = vst [vmem:[#allocation2] sm:$0x1] %v14
  $region1: #{tpu_custom_call.1} parent=0
    #allocation3 [shape = 'u8[1024]{0}', space=vmem, size = 0x400, scoped, tag = 'output window, operand 0']
    #allocation4 [shape = 's32[2]{0}', space=sflag, size = 0x8, scoped, tag = 'scoped memory for tpu_custom_call.1']
    %16 = vsyncpa [#allocation4], 0
    %s17 = scalar_lea.sflag [#allocation4], 1
    %18 = vsyncpa %s17, 0
    loop: start=0, step=1, limit=4
    $region2: #{tpu_custom_call.1} parent=1 // loop_pre_header
      _
    $region3: #{tpu_custom_call.1} parent=1 // loop_header
      %s20 = sphi 0, %s24
      %p21 = scmp.ge.s32.totalorder %s20, 4
      %s30 = sphi 0, %s32
      %s33 = sphi 0, %s30
      %s34 = sphi 0, %s33
      %s50 = sphi 0, %s34
      %s54 = sphi 0, %s54
      %s56 = sphi 0, %s54
      %s57 = sphi 0, %s56
      %s71 = sphi 0, %s57
      %s75 = sphi 0, %s75
      %s77 = sphi 0, %s75
      %s78 = sphi 0, %s77
      %s92 = sphi 0, %s78
      %s96 = sphi 0, %s96
      %s98 = sphi 0, %s96
      %s99 = sphi 0, %s98
      %s113 = sphi 0, %s99
      %s117 = sphi 0, %s117
      %s119 = sphi 0, %s117
      %s120 = sphi 0, %s119
      %s134 = sphi 0, %s120
      %s138 = sphi 0, %s138
      %s140 = sphi 0, %s138
      %s141 = sphi 0, %s140
      %s155 = sphi 0, %s141
      %s159 = sphi 0, %s159
      %s161 = sphi 0, %s159
      %s162 = sphi 0, %s161
      %s176 = sphi 0, %s162
      %s180 = sphi 0, %s180
      %s182 = sphi 0, %s180
      %s183 = sphi 0, %s182
      %s197 = sphi 0, %s183
      %s201 = sphi 0, %s201
      %s203 = sphi 0, %s201
      %s204 = sphi 0, %s203
      %s218 = sphi 0, %s204
      %s224 = sphi 0, %s226
      %s227 = sphi 0, %s224
      %s228 = sphi 0, %s227
      %s244 = sphi 0, %s228
    $region4: #{tpu_custom_call.1} parent=1 // loop_header_branch
      %23 = sbr.rel (%p21) target = $region8
    $region5: #{tpu_custom_call.1} parent=1 // loop_body
      %s25 = ssub.s32 %s20, 1
      %s26 = ssub.s32 %s20, 2
      %s27 = sadd.s32 %s20, 1
      %s28 = ssub.s32 %s20, %s27
      %p29 = scmp.eq.s32.totalorder %s28, 0
      %s31 = sadd.s32 %s30, 1
      %s32 = scalar_select %p29, %s30, %s31
      %p35 = pneg %p29
      %p36 = scmp.eq.s32.totalorder %s20, 1
      %p37 = por %p35, %p36
      %p38 = scmp.ne.s32.totalorder %s30, %s33
      %p39 = scmp.eq.s32.totalorder %s20, 0
      %p40 = por %p38, %p39
      %p41 = scmp.ne.s32.totalorder %s30, %s33
      %p42 = scmp.eq.s32.totalorder %s25, 1
      %p43 = por %p41, %p42
      %p44 = scmp.ne.s32.totalorder %s33, %s34
      %p45 = scmp.eq.s32.totalorder %s25, 0
      %p46 = por %p44, %p45
      %p47 = scmp.ne.s32.totalorder %s33, %s34
      %p48 = scmp.eq.s32.totalorder %s26, 1
      %p49 = por %p47, %p48
      %p51 = scmp.ne.s32.totalorder %s34, %s50
      %p52 = scmp.eq.s32.totalorder %s26, 0
      %p53 = por %p51, %p52
      %s55 = sadd.s32 %s54, 1
      %p58 = scmp.eq.s32.totalorder %s20, 1
      %p59 = scmp.ne.s32.totalorder %s54, %s56
      %p60 = scmp.eq.s32.totalorder %s20, 0
      %p61 = por %p59, %p60
      %p62 = scmp.ne.s32.totalorder %s54, %s56
      %p63 = scmp.eq.s32.totalorder %s25, 1
      %p64 = por %p62, %p63
      %p65 = scmp.ne.s32.totalorder %s56, %s57
      %p66 = scmp.eq.s32.totalorder %s25, 0
      %p67 = por %p65, %p66
      %p68 = scmp.ne.s32.totalorder %s56, %s57
      %p69 = scmp.eq.s32.totalorder %s26, 1
      %p70 = por %p68, %p69
      %p72 = scmp.ne.s32.totalorder %s57, %s71
      %p73 = scmp.eq.s32.totalorder %s26, 0
      %p74 = por %p72, %p73
      %s76 = sadd.s32 %s75, 1
      %p79 = scmp.eq.s32.totalorder %s20, 1
      %p80 = scmp.ne.s32.totalorder %s75, %s77
      %p81 = scmp.eq.s32.totalorder %s20, 0
      %p82 = por %p80, %p81
      %p83 = scmp.ne.s32.totalorder %s75, %s77
      %p84 = scmp.eq.s32.totalorder %s25, 1
      %p85 = por %p83, %p84
      %p86 = scmp.ne.s32.totalorder %s77, %s78
      %p87 = scmp.eq.s32.totalorder %s25, 0
      %p88 = por %p86, %p87
      %p89 = scmp.ne.s32.totalorder %s77, %s78
      %p90 = scmp.eq.s32.totalorder %s26, 1
      %p91 = por %p89, %p90
      %p93 = scmp.ne.s32.totalorder %s78, %s92
      %p94 = scmp.eq.s32.totalorder %s26, 0
      %p95 = por %p93, %p94
      %s97 = sadd.s32 %s96, 1
      %p100 = scmp.eq.s32.totalorder %s20, 1
      %p101 = scmp.ne.s32.totalorder %s96, %s98
      %p102 = scmp.eq.s32.totalorder %s20, 0
      %p103 = por %p101, %p102
      %p104 = scmp.ne.s32.totalorder %s96, %s98
      %p105 = scmp.eq.s32.totalorder %s25, 1
      %p106 = por %p104, %p105
      %p107 = scmp.ne.s32.totalorder %s98, %s99
      %p108 = scmp.eq.s32.totalorder %s25, 0
      %p109 = por %p107, %p108
      %p110 = scmp.ne.s32.totalorder %s98, %s99
      %p111 = scmp.eq.s32.totalorder %s26, 1
      %p112 = por %p110, %p111
      %p114 = scmp.ne.s32.totalorder %s99, %s113
      %p115 = scmp.eq.s32.totalorder %s26, 0
      %p116 = por %p114, %p115
      %s118 = sadd.s32 %s117, 1
      %p121 = scmp.eq.s32.totalorder %s20, 1
      %p122 = scmp.ne.s32.totalorder %s117, %s119
      %p123 = scmp.eq.s32.totalorder %s20, 0
      %p124 = por %p122, %p123
      %p125 = scmp.ne.s32.totalorder %s117, %s119
      %p126 = scmp.eq.s32.totalorder %s25, 1
      %p127 = por %p125, %p126
      %p128 = scmp.ne.s32.totalorder %s119, %s120
      %p129 = scmp.eq.s32.totalorder %s25, 0
      %p130 = por %p128, %p129
      %p131 = scmp.ne.s32.totalorder %s119, %s120
      %p132 = scmp.eq.s32.totalorder %s26, 1
      %p133 = por %p131, %p132
      %p135 = scmp.ne.s32.totalorder %s120, %s134
      %p136 = scmp.eq.s32.totalorder %s26, 0
      %p137 = por %p135, %p136
      %s139 = sadd.s32 %s138, 1
      %p142 = scmp.eq.s32.totalorder %s20, 1
      %p143 = scmp.ne.s32.totalorder %s138, %s140
      %p144 = scmp.eq.s32.totalorder %s20, 0
      %p145 = por %p143, %p144
      %p146 = scmp.ne.s32.totalorder %s138, %s140
      %p147 = scmp.eq.s32.totalorder %s25, 1
      %p148 = por %p146, %p147
      %p149 = scmp.ne.s32.totalorder %s140, %s141
      %p150 = scmp.eq.s32.totalorder %s25, 0
      %p151 = por %p149, %p150
      %p152 = scmp.ne.s32.totalorder %s140, %s141
      %p153 = scmp.eq.s32.totalorder %s26, 1
      %p154 = por %p152, %p153
      %p156 = scmp.ne.s32.totalorder %s141, %s155
      %p157 = scmp.eq.s32.totalorder %s26, 0
      %p158 = por %p156, %p157
      %s160 = sadd.s32 %s159, 1
      %p163 = scmp.eq.s32.totalorder %s20, 1
      %p164 = scmp.ne.s32.totalorder %s159, %s161
      %p165 = scmp.eq.s32.totalorder %s20, 0
      %p166 = por %p164, %p165
      %p167 = scmp.ne.s32.totalorder %s159, %s161
      %p168 = scmp.eq.s32.totalorder %s25, 1
      %p169 = por %p167, %p168
      %p170 = scmp.ne.s32.totalorder %s161, %s162
      %p171 = scmp.eq.s32.totalorder %s25, 0
      %p172 = por %p170, %p171
      %p173 = scmp.ne.s32.totalorder %s161, %s162
      %p174 = scmp.eq.s32.totalorder %s26, 1
      %p175 = por %p173, %p174
      %p177 = scmp.ne.s32.totalorder %s162, %s176
      %p178 = scmp.eq.s32.totalorder %s26, 0
      %p179 = por %p177, %p178
      %s181 = sadd.s32 %s180, 1
      %p184 = scmp.eq.s32.totalorder %s20, 1
      %p185 = scmp.ne.s32.totalorder %s180, %s182
      %p186 = scmp.eq.s32.totalorder %s20, 0
      %p187 = por %p185, %p186
      %p188 = scmp.ne.s32.totalorder %s180, %s182
      %p189 = scmp.eq.s32.totalorder %s25, 1
      %p190 = por %p188, %p189
      %p191 = scmp.ne.s32.totalorder %s182, %s183
      %p192 = scmp.eq.s32.totalorder %s25, 0
      %p193 = por %p191, %p192
      %p194 = scmp.ne.s32.totalorder %s182, %s183
      %p195 = scmp.eq.s32.totalorder %s26, 1
      %p196 = por %p194, %p195
      %p198 = scmp.ne.s32.totalorder %s183, %s197
      %p199 = scmp.eq.s32.totalorder %s26, 0
      %p200 = por %p198, %p199
      %s202 = sadd.s32 %s201, 1
      %p205 = scmp.eq.s32.totalorder %s20, 1
      %p206 = scmp.ne.s32.totalorder %s201, %s203
      %p207 = scmp.eq.s32.totalorder %s20, 0
      %p208 = por %p206, %p207
      %p209 = scmp.ne.s32.totalorder %s201, %s203
      %p210 = scmp.eq.s32.totalorder %s25, 1
      %p211 = por %p209, %p210
      %p212 = scmp.ne.s32.totalorder %s203, %s204
      %p213 = scmp.eq.s32.totalorder %s25, 0
      %p214 = por %p212, %p213
      %p215 = scmp.ne.s32.totalorder %s203, %s204
      %p216 = scmp.eq.s32.totalorder %s26, 1
      %p217 = por %p215, %p216
      %p219 = scmp.ne.s32.totalorder %s204, %s218
      %p220 = scmp.eq.s32.totalorder %s26, 0
      %p221 = por %p219, %p220
      %s222 = ssub.s32 %s20, %s27
      %p223 = scmp.eq.s32.totalorder %s222, 0
      %s225 = sadd.s32 %s224, 1
      %s226 = scalar_select %p223, %s224, %s225
      %p229 = pneg %p223
      %p230 = scmp.eq.s32.totalorder %s20, 1
      %p231 = por %p229, %p230
      %p232 = scmp.ne.s32.totalorder %s224, %s227
      %p233 = scmp.eq.s32.totalorder %s20, 0
      %p234 = por %p232, %p233
      %p235 = scmp.ne.s32.totalorder %s224, %s227
      %p236 = scmp.eq.s32.totalorder %s25, 1
      %p237 = por %p235, %p236
      %p238 = scmp.ne.s32.totalorder %s227, %s228
      %p239 = scmp.eq.s32.totalorder %s25, 0
      %p240 = por %p238, %p239
      %p241 = scmp.ne.s32.totalorder %s227, %s228
      %p242 = scmp.eq.s32.totalorder %s26, 1
      %p243 = por %p241, %p242
      %p245 = scmp.ne.s32.totalorder %s228, %s244
      %p246 = scmp.eq.s32.totalorder %s26, 0
      %p247 = por %p245, %p246
      %p248 = scmp.le.s32.totalorder 1, %s20
      %p249 = scmp.lt.s32.totalorder %s20, 3
      %p250 = pnand %p248, %p249
      %p251 = pneg %p250
      // Predicated region
      $region9: #{tpu_custom_call.1} parent=5 // pred_check
        _
      $region10: #{tpu_custom_call.1} parent=5 // pred_check_branch
        %253 = sbr.rel (%p250) target = $region12
      $region11: #{tpu_custom_call.1} parent=5 // pred_region
        %s254 = ssub.s32 %s20, 1
        // Predicated region
        $region13: #{tpu_custom_call.1} parent=11 // pred_check
          %p255 = pneg %p67
        $region14: #{tpu_custom_call.1} parent=11 // pred_check_branch
          %257 = sbr.rel (%p255) target = $region16
        $region15: #{tpu_custom_call.1} parent=11 // pred_region
          _
        $region16: #{tpu_custom_call.1} parent=11 // pred_fallthru
          _
        // Predicated region
        $region17: #{tpu_custom_call.1} parent=11 // pred_check
          %p258 = pneg %p88
        $region18: #{tpu_custom_call.1} parent=11 // pred_check_branch
          %260 = sbr.rel (%p258) target = $region20
        $region19: #{tpu_custom_call.1} parent=11 // pred_region
          _
        $region20: #{tpu_custom_call.1} parent=11 // pred_fallthru
          _
        // Predicated region
        $region21: #{tpu_custom_call.1} parent=11 // pred_check
          %p261 = pneg %p109
        $region22: #{tpu_custom_call.1} parent=11 // pred_check_branch
          %263 = sbr.rel (%p261) target = $region24
        $region23: #{tpu_custom_call.1} parent=11 // pred_region
          _
        $region24: #{tpu_custom_call.1} parent=11 // pred_fallthru
          _
        // Predicated region
        $region25: #{tpu_custom_call.1} parent=11 // pred_check
          %p264 = pneg %p130
        $region26: #{tpu_custom_call.1} parent=11 // pred_check_branch
          %266 = sbr.rel (%p264) target = $region28
        $region27: #{tpu_custom_call.1} parent=11 // pred_region
          _
        $region28: #{tpu_custom_call.1} parent=11 // pred_fallthru
          _
        // Predicated region
        $region29: #{tpu_custom_call.1} parent=11 // pred_check
          %p267 = pneg %p151
        $region30: #{tpu_custom_call.1} parent=11 // pred_check_branch
          %269 = sbr.rel (%p267) target = $region32
        $region31: #{tpu_custom_call.1} parent=11 // pred_region
          _
        $region32: #{tpu_custom_call.1} parent=11 // pred_fallthru
          _
        // Predicated region
        $region33: #{tpu_custom_call.1} parent=11 // pred_check
          %p270 = pneg %p172
        $region34: #{tpu_custom_call.1} parent=11 // pred_check_branch
          %272 = sbr.rel (%p270) target = $region36
        $region35: #{tpu_custom_call.1} parent=11 // pred_region
          _
        $region36: #{tpu_custom_call.1} parent=11 // pred_fallthru
          _
        // Predicated region
        $region37: #{tpu_custom_call.1} parent=11 // pred_check
          %p273 = pneg %p193
        $region38: #{tpu_custom_call.1} parent=11 // pred_check_branch
          %275 = sbr.rel (%p273) target = $region40
        $region39: #{tpu_custom_call.1} parent=11 // pred_region
          _
        $region40: #{tpu_custom_call.1} parent=11 // pred_fallthru
          _
        // Predicated region
        $region41: #{tpu_custom_call.1} parent=11 // pred_check
          %p276 = pneg %p214
        $region42: #{tpu_custom_call.1} parent=11 // pred_check_branch
          %278 = sbr.rel (%p276) target = $region44
        $region43: #{tpu_custom_call.1} parent=11 // pred_region
          _
        $region44: #{tpu_custom_call.1} parent=11 // pred_fallthru
          _
      $region12: #{tpu_custom_call.1} parent=5 // pred_fallthru
        _
      %p279 = scmp.lt.s32.totalorder %s20, 2
      // Predicated region
      $region45: #{tpu_custom_call.1} parent=5 // pred_check
        %p280 = pneg %p279
      $region46: #{tpu_custom_call.1} parent=5 // pred_check_branch
        %282 = sbr.rel (%p280) target = $region48
      $region47: #{tpu_custom_call.1} parent=5 // pred_region
        // Predicated region
        $region49: #{tpu_custom_call.1} parent=47 // pred_check
          %p283 = pneg %p40
        $region50: #{tpu_custom_call.1} parent=47 // pred_check_branch
          %285 = sbr.rel (%p283) target = $region52
        $region51: #{tpu_custom_call.1} parent=47 // pred_region
          %s286 = smul.u32 16, %s20
          %p287 = scmp.lt.s32.totalorder %s286, 31
          %s288 = scalar_select %p287, %s286, 31
          %s289 = smul.addr %s288, 4
          %s290 = scalar_lea.vmem %s0, %s289
          %s291 = smul.u32 16, %s20
        $region52: #{tpu_custom_call.1} parent=47 // pred_fallthru
          _
      $region48: #{tpu_custom_call.1} parent=5 // pred_fallthru
        _
      %p292 = scmp.le.s32.totalorder 1, %s20
      %p293 = scmp.lt.s32.totalorder %s20, 3
      %p294 = pnand %p292, %p293
      %p295 = pneg %p294
      // Predicated region
      $region53: #{tpu_custom_call.1} parent=5 // pred_check
        _
      $region54: #{tpu_custom_call.1} parent=5 // pred_check_branch
        %297 = sbr.rel (%p294) target = $region56
      $region55: #{tpu_custom_call.1} parent=5 // pred_region
        %s298 = ssub.s32 %s20, 1
        %s299 = smul.u32 16, %s25
        %p300 = scmp.lt.s32.totalorder %s299, 31
        %s301 = scalar_select %p300, %s299, 31
        %s302 = smul.addr %s301, 4
        %s303 = scalar_lea.vmem %s0, %s302
        %p304 = pneg %p46
        %p305 = pneg %p43
        %p306 = pneg %p67
        %p307 = pneg %p64
        %p308 = pneg %p88
        %p309 = pneg %p85
        %p310 = pneg %p109
        %p311 = pneg %p106
        %p312 = pneg %p130
        %p313 = pneg %p127
        %p314 = pneg %p151
        %p315 = pneg %p148
        %p316 = pneg %p172
        %p317 = pneg %p169
        %p318 = pneg %p193
        %p319 = pneg %p190
        %p320 = pneg %p214
        %p321 = pneg %p211
        %p322 = pneg %p240
        %p323 = pneg %p237
        %s324 = sand.u32 %s227, 1
        %s325 = scalar_lea.sflag [#allocation4], %s324
        %s326 = sand.u32 %s227, 1
        %s327 = scalar_lea.vmem [#allocation3], %s326
        %s328 = smul.u32 16, %s25
        %p329 = scmp.lt.s32.totalorder %s328, 31
        %s330 = scalar_select %p329, %s328, 31
        %s331 = smul.addr %s330, 4
        %s332 = scalar_lea.vmem %s0, %s331
        %s333 = smul.u32 16, %s25
        %v335 = vld [vmem:[%s332] sm:$0xf]
        %v336 = vld [vmem:[%s332 + $0x4] sm:$0xf]
        %v337 = vld [vmem:[%s332 + $0x8] sm:$0xf]
        %v338 = vld [vmem:[%s332 + $0xc] sm:$0xf]
        %v339 = vld [vmem:[%s332 + $0x10] sm:$0xf]
        %v340 = vld [vmem:[%s332 + $0x14] sm:$0xf]
        %v341 = vld [vmem:[%s332 + $0x18] sm:$0xf]
        %v342 = vld [vmem:[%s332 + $0x1c] sm:$0xf]
        %v343 = vld [vmem:[%s332 + $0x20] sm:$0xf]
        %v344 = vld [vmem:[%s332 + $0x24] sm:$0xf]
        %v345 = vld [vmem:[%s332 + $0x28] sm:$0xf]
        %v346 = vld [vmem:[%s332 + $0x2c] sm:$0xf]
        %v347 = vld [vmem:[%s332 + $0x30] sm:$0xf]
        %v348 = vld [vmem:[%s332 + $0x34] sm:$0xf]
        %v349 = vld [vmem:[%s332 + $0x38] sm:$0xf]
        %v350 = vld [vmem:[%s332 + $0x3c] sm:$0xf]
        %v351 = vld [vmem:[%s1] sm:$0xf]
        %v352 = vld [vmem:[%s1 + $0x4] sm:$0xf]
        %v353 = vld [vmem:[%s1 + $0x8] sm:$0xf]
        %v354 = vld [vmem:[%s1 + $0xc] sm:$0xf]
        %v355 = vld [vmem:[%s2] sm:$0x1]
        %v357 = vlaneseq
        %v358 = vshrl.u32 %v357, 7
        %v359 = vsub.s32 0, %v358
        %v360 = vrot.slane %v355, %v359
        %v378 = vunpack.c.l.b16 %v335
        %v379 = vunpack.c.l.b16 %v336
        %v380 = vunpack.c.l.b16 %v337
        %v381 = vunpack.c.l.b16 %v338
        %v382 = vunpack.c.l.b16 %v339
        %v383 = vunpack.c.l.b16 %v340
        %v384 = vunpack.c.l.b16 %v341
        %v385 = vunpack.c.l.b16 %v342
        %v386 = vunpack.c.l.b16 %v343
        %v387 = vunpack.c.l.b16 %v344
        %v388 = vunpack.c.l.b16 %v345
        %v389 = vunpack.c.l.b16 %v346
        %v390 = vunpack.c.l.b16 %v347
        %v391 = vunpack.c.l.b16 %v348
        %v392 = vunpack.c.l.b16 %v349
        %v393 = vunpack.c.l.b16 %v350
        %v394 = vpack.c.b16 %v379, %v378
        %v395 = vpack.c.b16 %v381, %v380
        %v396 = vpack.c.b16 %v383, %v382
        %v397 = vpack.c.b16 %v385, %v384
        %v398 = vpack.c.b16 %v387, %v386
        %v399 = vpack.c.b16 %v389, %v388
        %v400 = vpack.c.b16 %v391, %v390
        %v401 = vpack.c.b16 %v393, %v392
        %v406 = vunpack.c.l.b16 %v351
        %v407 = vunpack.c.l.b16 %v352
        %v408 = vunpack.c.l.b16 %v353
        %v409 = vunpack.c.l.b16 %v354
        %v410 = vpack.c.b16 %v407, %v406
        %v411 = vpack.c.b16 %v409, %v408
        %vm414 = vcmask 261120
        %v416 = vsel %vm414, %v394, 0
        %v419 = vsel %vm414, %v395, 0
        %v422 = vsel %vm414, %v396, 0
        %v425 = vsel %vm414, %v397, 0
        %v428 = vsel %vm414, %v398, 0
        %v431 = vsel %vm414, %v399, 0
        %v434 = vsel %vm414, %v400, 0
        %v437 = vsel %vm414, %v401, 0
        %439 = vmatprep.subr.bf16.mxu0 0
        %440 = vmatpush1.bf16.msra.mxu0 %v410
        %441 = vmatprep.subr.bf16.mxu0 0
        %442 = vmatpush1.bf16.msra.mxu0 %v411
        %443 = vmatprep.subr.bf16.mxu0 0
        %444 = vmatpush1.bf16.msra.mxu0 0
        %445 = vmatprep.subr.bf16.mxu0 0
        %446 = vmatpush1.bf16.msra.mxu0 0
        %447 = vmatprep.subr.bf16.mxu0 0
        %448 = vmatpush1.bf16.msra.mxu0 0
        %449 = vmatprep.subr.bf16.mxu0 0
        %450 = vmatpush1.bf16.msra.mxu0 0
        %451 = vmatprep.subr.bf16.mxu0 0
        %452 = vmatpush1.bf16.msra.mxu0 0
        %453 = vmatprep.subr.bf16.mxu0 0
        %454 = vmatpush1.bf16.msra.mxu0 0
        %455 = vmatprep.subr.bf16.mxu0 0
        %456 = vmatpush1.bf16.msra.mxu0 0
        %457 = vmatprep.subr.bf16.mxu0 0
        %458 = vmatpush1.bf16.msra.mxu0 0
        %459 = vmatprep.subr.bf16.mxu0 0
        %460 = vmatpush1.bf16.msra.mxu0 0
        %461 = vmatprep.subr.bf16.mxu0 0
        %462 = vmatpush1.bf16.msra.mxu0 0
        %463 = vmatprep.subr.bf16.mxu0 0
        %464 = vmatpush1.bf16.msra.mxu0 0
        %465 = vmatprep.subr.bf16.mxu0 0
        %466 = vmatpush1.bf16.msra.mxu0 0
        %467 = vmatprep.subr.bf16.mxu0 0
        %468 = vmatpush1.bf16.msra.mxu0 0
        %469 = vmatprep.subr.bf16.mxu0 0
        %470 = vmatpush1.bf16.msra.mxu0 0
        %471 = vmatprep.mubr.bf16.mxu0 0
        %472 = vmatmul.mubr.bf16.gmra.mrb[0].mxu0 %v416
        %v473 = vpop.f32.mrb[0].mxu0
        %v474 = vadd.f32 %v360, %v473
        %v475 = vpop.f32.mrb[0].mxu0
        %v476 = vpop.f32.mrb[0].mxu0
        %v477 = vadd.f32 %v360, %v476
        %v478 = vpop.f32.mrb[0].mxu0
        %479 = vmatprep.mubr.bf16.mxu0 0
        %480 = vmatmul.mubr.bf16.gmra.mrb[0].mxu0 %v419
        %v481 = vpop.f32.mrb[0].mxu0
        %v482 = vadd.f32 %v360, %v481
        %v483 = vpop.f32.mrb[0].mxu0
        %v484 = vpop.f32.mrb[0].mxu0
        %v485 = vadd.f32 %v360, %v484
        %v486 = vpop.f32.mrb[0].mxu0
        %487 = vmatprep.mubr.bf16.mxu0 0
        %488 = vmatmul.mubr.bf16.gmra.mrb[0].mxu0 %v422
        %v489 = vpop.f32.mrb[0].mxu0
        %v490 = vadd.f32 %v360, %v489
        %v491 = vpop.f32.mrb[0].mxu0
        %v492 = vpop.f32.mrb[0].mxu0
        %v493 = vadd.f32 %v360, %v492
        %v494 = vpop.f32.mrb[0].mxu0
        %495 = vmatprep.mubr.bf16.mxu0 0
        %496 = vmatmul.mubr.bf16.gmra.mrb[0].mxu0 %v425
        %v497 = vpop.f32.mrb[0].mxu0
        %v498 = vadd.f32 %v360, %v497
        %v499 = vpop.f32.mrb[0].mxu0
        %v500 = vpop.f32.mrb[0].mxu0
        %v501 = vadd.f32 %v360, %v500
        %v502 = vpop.f32.mrb[0].mxu0
        %503 = vmatprep.mubr.bf16.mxu0 0
        %504 = vmatmul.mubr.bf16.gmra.mrb[0].mxu0 %v428
        %v505 = vpop.f32.mrb[0].mxu0
        %v506 = vadd.f32 %v360, %v505
        %v507 = vpop.f32.mrb[0].mxu0
        %v508 = vpop.f32.mrb[0].mxu0
        %v509 = vadd.f32 %v360, %v508
        %v510 = vpop.f32.mrb[0].mxu0
        %511 = vmatprep.mubr.bf16.mxu0 0
        %512 = vmatmul.mubr.bf16.gmra.mrb[0].mxu0 %v431
        %v513 = vpop.f32.mrb[0].mxu0
        %v514 = vadd.f32 %v360, %v513
        %v515 = vpop.f32.mrb[0].mxu0
        %v516 = vpop.f32.mrb[0].mxu0
        %v517 = vadd.f32 %v360, %v516
        %v518 = vpop.f32.mrb[0].mxu0
        %519 = vmatprep.mubr.bf16.mxu0 0
        %520 = vmatmul.mubr.bf16.gmra.mrb[0].mxu0 %v434
        %v521 = vpop.f32.mrb[0].mxu0
        %v522 = vadd.f32 %v360, %v521
        %v523 = vpop.f32.mrb[0].mxu0
        %v524 = vpop.f32.mrb[0].mxu0
        %v525 = vadd.f32 %v360, %v524
        %v526 = vpop.f32.mrb[0].mxu0
        %527 = vmatprep.mubr.bf16.mxu0 0
        %528 = vmatmul.mubr.bf16.gmra.mrb[0].mxu0 %v437
        %v529 = vpop.f32.mrb[0].mxu0
        %v530 = vadd.f32 %v360, %v529
        %v531 = vpop.f32.mrb[0].mxu0
        %v532 = vpop.f32.mrb[0].mxu0
        %v533 = vadd.f32 %v360, %v532
        %v534 = vpop.f32.mrb[0].mxu0
        %535 = vdwg.mxu0
        %v536 = vmax.f32 %v474, 0.0
        %v537 = vmax.f32 %v477, 0.0
        %v538 = vmax.f32 %v482, 0.0
        %v539 = vmax.f32 %v485, 0.0
        %v540 = vmax.f32 %v490, 0.0
        %v541 = vmax.f32 %v493, 0.0
        %v542 = vmax.f32 %v498, 0.0
        %v543 = vmax.f32 %v501, 0.0
        %v544 = vmax.f32 %v506, 0.0
        %v545 = vmax.f32 %v509, 0.0
        %v546 = vmax.f32 %v514, 0.0
        %v547 = vmax.f32 %v517, 0.0
        %v548 = vmax.f32 %v522, 0.0
        %v549 = vmax.f32 %v525, 0.0
        %v550 = vmax.f32 %v530, 0.0
        %v551 = vmax.f32 %v533, 0.0
        %v552 = vpack.c.bf16 %v537, %v536
        %v553 = vpack.c.bf16 %v539, %v538
        %v554 = vpack.c.bf16 %v541, %v540
        %v555 = vpack.c.bf16 %v543, %v542
        %v556 = vpack.c.bf16 %v545, %v544
        %v557 = vpack.c.bf16 %v547, %v546
        %v558 = vpack.c.bf16 %v549, %v548
        %v559 = vpack.c.bf16 %v551, %v550
        %v560 = vld [vmem:[%s3] sm:$0xf]
        %v561 = vld [vmem:[%s3 + $0x4] sm:$0xf]
        %v562 = vld [vmem:[%s3 + $0x8] sm:$0xf]
        %v563 = vld [vmem:[%s3 + $0xc] sm:$0xf]
        %v564 = vld [vmem:[%s3 + $0x10] sm:$0xf]
        %v565 = vld [vmem:[%s3 + $0x14] sm:$0xf]
        %v566 = vld [vmem:[%s3 + $0x18] sm:$0xf]
        %v567 = vld [vmem:[%s3 + $0x1c] sm:$0xf]
        %v568 = vld [vmem:[%s3 + $0x20] sm:$0xf]
        %v569 = vld [vmem:[%s3 + $0x24] sm:$0xf]
        %v570 = vld [vmem:[%s3 + $0x28] sm:$0xf]
        %v571 = vld [vmem:[%s3 + $0x2c] sm:$0xf]
        %v572 = vld [vmem:[%s3 + $0x30] sm:$0xf]
        %v573 = vld [vmem:[%s3 + $0x34] sm:$0xf]
        %v574 = vld [vmem:[%s3 + $0x38] sm:$0xf]
        %v575 = vld [vmem:[%s3 + $0x3c] sm:$0xf]
        %v576 = vld [vmem:[%s4] sm:$0x1]
        %v578 = vlaneseq
        %v579 = vshrl.u32 %v578, 7
        %v580 = vsub.s32 0, %v579
        %v581 = vrot.slane %v576, %v580
        %v599 = vunpack.c.l.b16 %v560
        %v600 = vunpack.c.l.b16 %v561
        %v601 = vunpack.c.l.b16 %v562
        %v602 = vunpack.c.l.b16 %v563
        %v603 = vunpack.c.l.b16 %v564
        %v604 = vunpack.c.l.b16 %v565
        %v605 = vunpack.c.l.b16 %v566
        %v606 = vunpack.c.l.b16 %v567
        %v607 = vunpack.c.l.b16 %v568
        %v608 = vunpack.c.l.b16 %v569
        %v609 = vunpack.c.l.b16 %v570
        %v610 = vunpack.c.l.b16 %v571
        %v611 = vunpack.c.l.b16 %v572
        %v612 = vunpack.c.l.b16 %v573
        %v613 = vunpack.c.l.b16 %v574
        %v614 = vunpack.c.l.b16 %v575
        %v615 = vpack.c.b16 %v600, %v599
        %v616 = vpack.c.b16 %v602, %v601
        %v617 = vpack.c.b16 %v604, %v603
        %v618 = vpack.c.b16 %v606, %v605
        %v619 = vpack.c.b16 %v608, %v607
        %v620 = vpack.c.b16 %v610, %v609
        %v621 = vpack.c.b16 %v612, %v611
        %v622 = vpack.c.b16 %v614, %v613
        %631 = vmatprep.subr.bf16.mxu0 0
        %632 = vmatpush1.bf16.msra.mxu0 %v615
        %633 = vmatprep.subr.bf16.mxu0 0
        %634 = vmatpush1.bf16.msra.mxu0 %v616
        %635 = vmatprep.subr.bf16.mxu0 0
        %636 = vmatpush1.bf16.msra.mxu0 %v617
        %637 = vmatprep.subr.bf16.mxu0 0
        %638 = vmatpush1.bf16.msra.mxu0 %v618
        %639 = vmatprep.subr.bf16.mxu0 0
        %640 = vmatpush1.bf16.msra.mxu0 %v619
        %641 = vmatprep.subr.bf16.mxu0 0
        %642 = vmatpush1.bf16.msra.mxu0 %v620
        %643 = vmatprep.subr.bf16.mxu0 0
        %644 = vmatpush1.bf16.msra.mxu0 %v621
        %645 = vmatprep.subr.bf16.mxu0 0
        %646 = vmatpush1.bf16.msra.mxu0 %v622
        %647 = vmatprep.subr.bf16.mxu0 0
        %648 = vmatpush1.bf16.msra.mxu0 0
        %649 = vmatprep.subr.bf16.mxu0 0
        %650 = vmatpush1.bf16.msra.mxu0 0
        %651 = vmatprep.subr.bf16.mxu0 0
        %652 = vmatpush1.bf16.msra.mxu0 0
        %653 = vmatprep.subr.bf16.mxu0 0
        %654 = vmatpush1.bf16.msra.mxu0 0
        %655 = vmatprep.subr.bf16.mxu0 0
        %656 = vmatpush1.bf16.msra.mxu0 0
        %657 = vmatprep.subr.bf16.mxu0 0
        %658 = vmatpush1.bf16.msra.mxu0 0
        %659 = vmatprep.subr.bf16.mxu0 0
        %660 = vmatpush1.bf16.msra.mxu0 0
        %661 = vmatprep.subr.bf16.mxu0 0
        %662 = vmatpush1.bf16.msra.mxu0 0
        %663 = vmatprep.mubr.bf16.mxu0 0
        %664 = vmatmul.mubr.bf16.gmra.mrb[0].mxu0 %v552
        %v665 = vpop.f32.mrb[0].mxu0
        %v666 = vadd.f32 %v581, %v665
        %v667 = vpop.f32.mrb[0].mxu0
        %v668 = vpop.f32.mrb[0].mxu0
        %v669 = vadd.f32 %v581, %v668
        %v670 = vpop.f32.mrb[0].mxu0
        %671 = vmatprep.mubr.bf16.mxu0 0
        %672 = vmatmul.mubr.bf16.gmra.mrb[0].mxu0 %v553
        %v673 = vpop.f32.mrb[0].mxu0
        %v674 = vadd.f32 %v581, %v673
        %v675 = vpop.f32.mrb[0].mxu0
        %v676 = vpop.f32.mrb[0].mxu0
        %v677 = vadd.f32 %v581, %v676
        %v678 = vpop.f32.mrb[0].mxu0
        %679 = vmatprep.mubr.bf16.mxu0 0
        %680 = vmatmul.mubr.bf16.gmra.mrb[0].mxu0 %v554
        %v681 = vpop.f32.mrb[0].mxu0
        %v682 = vadd.f32 %v581, %v681
        %v683 = vpop.f32.mrb[0].mxu0
        %v684 = vpop.f32.mrb[0].mxu0
        %v685 = vadd.f32 %v581, %v684
        %v686 = vpop.f32.mrb[0].mxu0
        %687 = vmatprep.mubr.bf16.mxu0 0
        %688 = vmatmul.mubr.bf16.gmra.mrb[0].mxu0 %v555
        %v689 = vpop.f32.mrb[0].mxu0
        %v690 = vadd.f32 %v581, %v689
        %v691 = vpop.f32.mrb[0].mxu0
        %v692 = vpop.f32.mrb[0].mxu0
        %v693 = vadd.f32 %v581, %v692
        %v694 = vpop.f32.mrb[0].mxu0
        %695 = vmatprep.mubr.bf16.mxu0 0
        %696 = vmatmul.mubr.bf16.gmra.mrb[0].mxu0 %v556
        %v697 = vpop.f32.mrb[0].mxu0
        %v698 = vadd.f32 %v581, %v697
        %v699 = vpop.f32.mrb[0].mxu0
        %v700 = vpop.f32.mrb[0].mxu0
        %v701 = vadd.f32 %v581, %v700
        %v702 = vpop.f32.mrb[0].mxu0
        %703 = vmatprep.mubr.bf16.mxu0 0
        %704 = vmatmul.mubr.bf16.gmra.mrb[0].mxu0 %v557
        %v705 = vpop.f32.mrb[0].mxu0
        %v706 = vadd.f32 %v581, %v705
        %v707 = vpop.f32.mrb[0].mxu0
        %v708 = vpop.f32.mrb[0].mxu0
        %v709 = vadd.f32 %v581, %v708
        %v710 = vpop.f32.mrb[0].mxu0
        %711 = vmatprep.mubr.bf16.mxu0 0
        %712 = vmatmul.mubr.bf16.gmra.mrb[0].mxu0 %v558
        %v713 = vpop.f32.mrb[0].mxu0
        %v714 = vadd.f32 %v581, %v713
        %v715 = vpop.f32.mrb[0].mxu0
        %v716 = vpop.f32.mrb[0].mxu0
        %v717 = vadd.f32 %v581, %v716
        %v718 = vpop.f32.mrb[0].mxu0
        %719 = vmatprep.mubr.bf16.mxu0 0
        %720 = vmatmul.mubr.bf16.gmra.mrb[0].mxu0 %v559
        %v721 = vpop.f32.mrb[0].mxu0
        %v722 = vadd.f32 %v581, %v721
        %v723 = vpop.f32.mrb[0].mxu0
        %v724 = vpop.f32.mrb[0].mxu0
        %v725 = vadd.f32 %v581, %v724
        %v726 = vpop.f32.mrb[0].mxu0
        %727 = vdwg.mxu0
        %v728 = vmax.f32 %v666, 0.0
        %v729 = vmax.f32 %v669, 0.0
        %v730 = vmax.f32 %v674, 0.0
        %v731 = vmax.f32 %v677, 0.0
        %v732 = vmax.f32 %v682, 0.0
        %v733 = vmax.f32 %v685, 0.0
        %v734 = vmax.f32 %v690, 0.0
        %v735 = vmax.f32 %v693, 0.0
        %v736 = vmax.f32 %v698, 0.0
        %v737 = vmax.f32 %v701, 0.0
        %v738 = vmax.f32 %v706, 0.0
        %v739 = vmax.f32 %v709, 0.0
        %v740 = vmax.f32 %v714, 0.0
        %v741 = vmax.f32 %v717, 0.0
        %v742 = vmax.f32 %v722, 0.0
        %v743 = vmax.f32 %v725, 0.0
        %v744 = vpack.c.bf16 %v729, %v728
        %v745 = vpack.c.bf16 %v731, %v730
        %v746 = vpack.c.bf16 %v733, %v732
        %v747 = vpack.c.bf16 %v735, %v734
        %v748 = vpack.c.bf16 %v737, %v736
        %v749 = vpack.c.bf16 %v739, %v738
        %v750 = vpack.c.bf16 %v741, %v740
        %v751 = vpack.c.bf16 %v743, %v742
        %v752 = vld [vmem:[%s5] sm:$0xf]
        %v753 = vld [vmem:[%s5 + $0x4] sm:$0xf]
        %v754 = vld [vmem:[%s5 + $0x8] sm:$0xf]
        %v755 = vld [vmem:[%s5 + $0xc] sm:$0xf]
        %v756 = vld [vmem:[%s5 + $0x10] sm:$0xf]
        %v757 = vld [vmem:[%s5 + $0x14] sm:$0xf]
        %v758 = vld [vmem:[%s5 + $0x18] sm:$0xf]
        %v759 = vld [vmem:[%s5 + $0x1c] sm:$0xf]
        %v760 = vld [vmem:[%s6] sm:$0x1]
        %v762 = vlaneseq
        %v763 = vshrl.u32 %v762, 7
        %v764 = vsub.s32 0, %v763
        %v765 = vrot.slane %v760, %v764
        %v775 = vunpack.c.l.b16 %v752
        %v776 = vunpack.c.l.b16 %v753
        %v777 = vunpack.c.l.b16 %v754
        %v778 = vunpack.c.l.b16 %v755
        %v779 = vunpack.c.l.b16 %v756
        %v780 = vunpack.c.l.b16 %v757
        %v781 = vunpack.c.l.b16 %v758
        %v782 = vunpack.c.l.b16 %v759
        %v783 = vpack.c.b16 %v776, %v775
        %v784 = vpack.c.b16 %v778, %v777
        %v785 = vpack.c.b16 %v780, %v779
        %v786 = vpack.c.b16 %v782, %v781
        %vm791 = vcmask 523264
        %v793 = vsel %vm791, %v744, 0
        %v796 = vsel %vm791, %v745, 0
        %v799 = vsel %vm791, %v746, 0
        %v802 = vsel %vm791, %v747, 0
        %v805 = vsel %vm791, %v748, 0
        %v808 = vsel %vm791, %v749, 0
        %v811 = vsel %vm791, %v750, 0
        %v814 = vsel %vm791, %v751, 0
        %816 = vmatprep.subr.bf16.mxu0 0
        %817 = vmatpush1.bf16.msra.mxu0 %v783
        %818 = vmatprep.subr.bf16.mxu0 0
        %819 = vmatpush1.bf16.msra.mxu0 %v784
        %820 = vmatprep.subr.bf16.mxu0 0
        %821 = vmatpush1.bf16.msra.mxu0 %v785
        %822 = vmatprep.subr.bf16.mxu0 0
        %823 = vmatpush1.bf16.msra.mxu0 %v786
        %824 = vmatprep.subr.bf16.mxu0 0
        %825 = vmatpush1.bf16.msra.mxu0 0
        %826 = vmatprep.subr.bf16.mxu0 0
        %827 = vmatpush1.bf16.msra.mxu0 0
        %828 = vmatprep.subr.bf16.mxu0 0
        %829 = vmatpush1.bf16.msra.mxu0 0
        %830 = vmatprep.subr.bf16.mxu0 0
        %831 = vmatpush1.bf16.msra.mxu0 0
        %832 = vmatprep.subr.bf16.mxu0 0
        %833 = vmatpush1.bf16.msra.mxu0 0
        %834 = vmatprep.subr.bf16.mxu0 0
        %835 = vmatpush1.bf16.msra.mxu0 0
        %836 = vmatprep.subr.bf16.mxu0 0
        %837 = vmatpush1.bf16.msra.mxu0 0
        %838 = vmatprep.subr.bf16.mxu0 0
        %839 = vmatpush1.bf16.msra.mxu0 0
        %840 = vmatprep.subr.bf16.mxu0 0
        %841 = vmatpush1.bf16.msra.mxu0 0
        %842 = vmatprep.subr.bf16.mxu0 0
        %843 = vmatpush1.bf16.msra.mxu0 0
        %844 = vmatprep.subr.bf16.mxu0 0
        %845 = vmatpush1.bf16.msra.mxu0 0
        %846 = vmatprep.subr.bf16.mxu0 0
        %847 = vmatpush1.bf16.msra.mxu0 0
        %848 = vmatprep.mubr.bf16.mxu0 0
        %849 = vmatmul.mubr.bf16.gmra.mrb[0].mxu0 %v793
        %v850 = vpop.f32.mrb[0].mxu0
        %v851 = vadd.f32 %v765, %v850
        %v852 = vpop.f32.mrb[0].mxu0
        %v853 = vpop.f32.mrb[0].mxu0
        %v854 = vadd.f32 %v765, %v853
        %v855 = vpop.f32.mrb[0].mxu0
        %856 = vmatprep.mubr.bf16.mxu0 0
        %857 = vmatmul.mubr.bf16.gmra.mrb[0].mxu0 %v796
        %v858 = vpop.f32.mrb[0].mxu0
        %v859 = vadd.f32 %v765, %v858
        %v860 = vpop.f32.mrb[0].mxu0
        %v861 = vpop.f32.mrb[0].mxu0
        %v862 = vadd.f32 %v765, %v861
        %v863 = vpop.f32.mrb[0].mxu0
        %864 = vmatprep.mubr.bf16.mxu0 0
        %865 = vmatmul.mubr.bf16.gmra.mrb[0].mxu0 %v799
        %v866 = vpop.f32.mrb[0].mxu0
        %v867 = vadd.f32 %v765, %v866
        %v868 = vpop.f32.mrb[0].mxu0
        %v869 = vpop.f32.mrb[0].mxu0
        %v870 = vadd.f32 %v765, %v869
        %v871 = vpop.f32.mrb[0].mxu0
        %872 = vmatprep.mubr.bf16.mxu0 0
        %873 = vmatmul.mubr.bf16.gmra.mrb[0].mxu0 %v802
        %v874 = vpop.f32.mrb[0].mxu0
        %v875 = vadd.f32 %v765, %v874
        %v876 = vpop.f32.mrb[0].mxu0
        %v877 = vpop.f32.mrb[0].mxu0
        %v878 = vadd.f32 %v765, %v877
        %v879 = vpop.f32.mrb[0].mxu0
        %880 = vmatprep.mubr.bf16.mxu0 0
        %881 = vmatmul.mubr.bf16.gmra.mrb[0].mxu0 %v805
        %v882 = vpop.f32.mrb[0].mxu0
        %v883 = vadd.f32 %v765, %v882
        %v884 = vpop.f32.mrb[0].mxu0
        %v885 = vpop.f32.mrb[0].mxu0
        %v886 = vadd.f32 %v765, %v885
        %v887 = vpop.f32.mrb[0].mxu0
        %888 = vmatprep.mubr.bf16.mxu0 0
        %889 = vmatmul.mubr.bf16.gmra.mrb[0].mxu0 %v808
        %v890 = vpop.f32.mrb[0].mxu0
        %v891 = vadd.f32 %v765, %v890
        %v892 = vpop.f32.mrb[0].mxu0
        %v893 = vpop.f32.mrb[0].mxu0
        %v894 = vadd.f32 %v765, %v893
        %v895 = vpop.f32.mrb[0].mxu0
        %896 = vmatprep.mubr.bf16.mxu0 0
        %897 = vmatmul.mubr.bf16.gmra.mrb[0].mxu0 %v811
        %v898 = vpop.f32.mrb[0].mxu0
        %v899 = vadd.f32 %v765, %v898
        %v900 = vpop.f32.mrb[0].mxu0
        %v901 = vpop.f32.mrb[0].mxu0
        %v902 = vadd.f32 %v765, %v901
        %v903 = vpop.f32.mrb[0].mxu0
        %904 = vmatprep.mubr.bf16.mxu0 0
        %905 = vmatmul.mubr.bf16.gmra.mrb[0].mxu0 %v814
        %v906 = vpop.f32.mrb[0].mxu0
        %v907 = vadd.f32 %v765, %v906
        %v908 = vpop.f32.mrb[0].mxu0
        %v909 = vpop.f32.mrb[0].mxu0
        %v910 = vadd.f32 %v765, %v909
        %v911 = vpop.f32.mrb[0].mxu0
        %912 = vdwg.mxu0
        %v913 = vmax.f32 %v851, 0.0
        %v914 = vmax.f32 %v854, 0.0
        %v915 = vmax.f32 %v859, 0.0
        %v916 = vmax.f32 %v862, 0.0
        %v917 = vmax.f32 %v867, 0.0
        %v918 = vmax.f32 %v870, 0.0
        %v919 = vmax.f32 %v875, 0.0
        %v920 = vmax.f32 %v878, 0.0
        %v921 = vmax.f32 %v883, 0.0
        %v922 = vmax.f32 %v886, 0.0
        %v923 = vmax.f32 %v891, 0.0
        %v924 = vmax.f32 %v894, 0.0
        %v925 = vmax.f32 %v899, 0.0
        %v926 = vmax.f32 %v902, 0.0
        %v927 = vmax.f32 %v907, 0.0
        %v928 = vmax.f32 %v910, 0.0
        %v929 = vld [vmem:[%s7] sm:$0x1]
        %v930 = vld [vmem:[#allocation2] sm:$0x1]
        %932 = vset.pattern.permute.xlu0 0
        %933 = vperm.xlu0 %932, %v930
        %v934 = vpop.permute.xlu0 %933
        %v936 = vlaneseq
        %v937 = vshrl.u32 %v936, 7
        %v938 = vsub.s32 0, %v937
        %v939 = vrot.slane %v934, %v938
        %v941 = vsel %vm414, %v929, 0
        %v944 = vsel %vm414, %v913, 0
        %v947 = vsel %vm414, %v914, 0
        %v950 = vsel %vm414, %v915, 0
        %v953 = vsel %vm414, %v916, 0
        %v956 = vsel %vm414, %v917, 0
        %v959 = vsel %vm414, %v918, 0
        %v962 = vsel %vm414, %v919, 0
        %v965 = vsel %vm414, %v920, 0
        %v968 = vsel %vm414, %v921, 0
        %v971 = vsel %vm414, %v922, 0
        %v974 = vsel %vm414, %v923, 0
        %v977 = vsel %vm414, %v924, 0
        %v980 = vsel %vm414, %v925, 0
        %v983 = vsel %vm414, %v926, 0
        %v986 = vsel %vm414, %v927, 0
        %v989 = vsel %vm414, %v928, 0
        %991 = vmatprep.subr.mxu0 0.0
        %992 = vmatpush1.xpose.msra.mxu0 %v944
        %993 = vmatprep.subr.mxu0 0.0
        %994 = vmatpush1.xpose.msra.mxu0 %v947
        %995 = vmatprep.subr.mxu0 0.0
        %996 = vmatpush1.xpose.msra.mxu0 %v950
        %997 = vmatprep.subr.mxu0 0.0
        %998 = vmatpush1.xpose.msra.mxu0 %v953
        %999 = vmatprep.subr.mxu0 0.0
        %1000 = vmatpush1.xpose.msra.mxu0 %v956
        %1001 = vmatprep.subr.mxu0 0.0
        %1002 = vmatpush1.xpose.msra.mxu0 %v959
        %1003 = vmatprep.subr.mxu0 0.0
        %1004 = vmatpush1.xpose.msra.mxu0 %v962
        %1005 = vmatprep.subr.mxu0 0.0
        %1006 = vmatpush1.xpose.msra.mxu0 %v965
        %1007 = vmatprep.subr.mxu0 0.0
        %1008 = vmatpush1.xpose.msra.mxu0 %v968
        %1009 = vmatprep.subr.mxu0 0.0
        %1010 = vmatpush1.xpose.msra.mxu0 %v971
        %1011 = vmatprep.subr.mxu0 0.0
        %1012 = vmatpush1.xpose.msra.mxu0 %v974
        %1013 = vmatprep.subr.mxu0 0.0
        %1014 = vmatpush1.xpose.msra.mxu0 %v977
        %1015 = vmatprep.subr.mxu0 0.0
        %1016 = vmatpush1.xpose.msra.mxu0 %v980
        %1017 = vmatprep.subr.mxu0 0.0
        %1018 = vmatpush1.xpose.msra.mxu0 %v983
        %1019 = vmatprep.subr.mxu0 0.0
        %1020 = vmatpush1.xpose.msra.mxu0 %v986
        %1021 = vmatprep.subr.mxu0 0.0
        %1022 = vmatpush1.xpose.msra.mxu0 %v989
        %1023 = vmatprep.subr.mxu0 0.0
        %1024 = vmatpush1.xpose.msra.mxu0 0.0
        %1025 = vmatprep.subr.mxu0 0.0
        %1026 = vmatpush1.xpose.msra.mxu0 0.0
        %1027 = vmatprep.subr.mxu0 0.0
        %1028 = vmatpush1.xpose.msra.mxu0 0.0
        %1029 = vmatprep.subr.mxu0 0.0
        %1030 = vmatpush1.xpose.msra.mxu0 0.0
        %1031 = vmatprep.subr.mxu0 0.0
        %1032 = vmatpush1.xpose.msra.mxu0 0.0
        %1033 = vmatprep.subr.mxu0 0.0
        %1034 = vmatpush1.xpose.msra.mxu0 0.0
        %1035 = vmatprep.subr.mxu0 0.0
        %1036 = vmatpush1.xpose.msra.mxu0 0.0
        %1037 = vmatprep.subr.mxu0 0.0
        %1038 = vmatpush1.xpose.msra.mxu0 0.0
        %1039 = vmatprep.subr.mxu0 0.0
        %1040 = vmatpush1.xpose.msra.mxu0 0.0
        %1041 = vmatprep.subr.mxu0 0.0
        %1042 = vmatpush1.xpose.msra.mxu0 0.0
        %1043 = vmatprep.subr.mxu0 0.0
        %1044 = vmatpush1.xpose.msra.mxu0 0.0
        %1045 = vmatprep.subr.mxu0 0.0
        %1046 = vmatpush1.xpose.msra.mxu0 0.0
        %1047 = vmatprep.subr.mxu0 0.0
        %1048 = vmatpush1.xpose.msra.mxu0 0.0
        %1049 = vmatprep.subr.mxu0 0.0
        %1050 = vmatpush1.xpose.msra.mxu0 0.0
        %1051 = vmatprep.subr.mxu0 0.0
        %1052 = vmatpush1.xpose.msra.mxu0 0.0
        %1053 = vmatprep.subr.mxu0 0.0
        %1054 = vmatpush1.xpose.msra.mxu0 0.0
        %1055 = vmatprep.mubr.f32.mxu0 0.0
        %1056 = vmatmul.mubr.f32.gmra.mrb[0].mxu0 %v941
        %v1057 = vpop.f32.mrb[0].mxu0
        %v1058 = vadd.f32 %v939, %v1057
        %v1059 = vpop.f32.mrb[0].mxu0
        %1060 = vdwg.mxu0
        %v1061 = vxor.u32 %v1058, 2147483648
        %v1062 = vmul.f32 %v1061, 1.442695
        %v1063 = vpow.pop %v1062
        %v1064 = vadd.f32 %v1063, 1.0
        %v1065 = vrcp.pop %v1064
        %v1066 = vmul.f32 1.0, %v1065
        %1067 = vst [vmem:[%s327] sm:$0x1] %v1066
        %s1068 = sand.u32 %s227, 1
        %s1069 = scalar_lea.sflag [#allocation4], %s1068
        %s1070 = sand.u32 %s227, 1
        %s1071 = scalar_lea.vmem [#allocation3], %s1070
        // Predicated region
        $region57: #{tpu_custom_call.1} parent=55 // pred_check
          %p1072 = pneg %p237
        $region58: #{tpu_custom_call.1} parent=55 // pred_check_branch
          %1074 = sbr.rel (%p1072) target = $region60
        $region59: #{tpu_custom_call.1} parent=55 // pred_region
          %s1076 = ssub.s32 16, 16
          %1077 = vsyncadd %s1069, %s1076
          %s1078 = smul.addr %s25, 16
          %s1079 = scalar_lea.hbm %s9, %s1078
          %s1081 = sshll.u32 %s1071, 4
          %s1082 = int_to_ptr.vmem [resolvable:$true] %s1081
          %1084 = dma.vmem_to_hbm [thread:$0]  %s1082, 16, %s1079, %s1069
        $region60: #{tpu_custom_call.1} parent=55 // pred_fallthru
          _
      $region56: #{tpu_custom_call.1} parent=5 // pred_fallthru
        _
      %p1085 = scmp.le.s32.totalorder 2, %s20
      // Predicated region
      $region61: #{tpu_custom_call.1} parent=5 // pred_check
        %p1086 = pneg %p1085
      $region62: #{tpu_custom_call.1} parent=5 // pred_check_branch
        %1088 = sbr.rel (%p1086) target = $region64
      $region63: #{tpu_custom_call.1} parent=5 // pred_region
        %s1089 = ssub.s32 %s20, 2
        // Predicated region
        $region65: #{tpu_custom_call.1} parent=63 // pred_check
          %p1090 = pneg %p243
        $region66: #{tpu_custom_call.1} parent=63 // pred_check_branch
          %1092 = sbr.rel (%p1090) target = $region68
        $region67: #{tpu_custom_call.1} parent=63 // pred_region
          %s1093 = sand.u32 %s228, 1
          %s1094 = scalar_lea.sflag [#allocation4], %s1093
          %s1095 = sand.u32 %s228, 1
          %s1096 = scalar_lea.vmem [#allocation3], %s1095
          %1097 = dma.done %s1094, 16
        $region68: #{tpu_custom_call.1} parent=63 // pred_fallthru
          _
      $region64: #{tpu_custom_call.1} parent=5 // pred_fallthru
        _
    $region6: #{tpu_custom_call.1} parent=1 // loop_footer
      %s24 = sadd.s32 1, %s20
    $region7: #{tpu_custom_call.1} parent=1 // loop_footer_branch
      %19 = sbr.rel target = $region3
    $region8: #{tpu_custom_call.1} parent=1 // loop_exit
      _
    %1098 = vsyncpa [#allocation4], 1
    %s1099 = scalar_lea.sflag [#allocation4], 1
    %1100 = vsyncpa %s1099, 1

</llo_original>
